<compile_context>
chip_gen: v7x
topology: tpu7x:2x2x1
jax: 0.10.0
libtpu: 0.0.40
codegen_flags: <defaults>
</compile_context>

<pallas_src>
import functools

import jax
import jax.numpy as jnp
from jax.experimental import pallas as pl
from jax.experimental.pallas import tpu as pltpu


def _round_up(x, m):
    return ((x + m - 1) // m) * m


def toynn_kernel(x_ref, w1_ref, b1_ref, w2_ref, b2_ref, hid_ref, out_ref):
    x = x_ref[...]                      # (TILE_B, 1)
    w1 = w1_ref[...]                    # (1, Hp)   == W1^T (zero-padded lanes)
    b1 = b1_ref[...]                    # (1, Hp)
    w2 = w2_ref[...]                    # (1, Hp)   (zero-padded lanes)
    b2 = b2_ref[0, 0]                   # scalar, SMEM

    # Linear(1 -> H): x @ W1^T + b1  ==  broadcast outer product on the VPU.
    hidden = jnp.maximum(x * w1 + b1, 0.0)                         # (TILE_B, Hp)
    hid_ref[...] = hidden

    # Linear(H -> 1): lane reduction (XLU); zero-padded lanes contribute 0.
    out_ref[...] = jnp.sum(hidden * w2, axis=-1, keepdims=True) + b2


def _choose_tile_b(B, Hp):
    # Keep the double-buffered f32 hidden tile within ~16 MiB so the whole
    # pipeline (input/output tiles + resident weights) fits v7x's 32 MiB
    # default scoped VMEM with headroom.  Cap at 1024 rows; multiple of 8.
    budget_bytes = 16 * 1024 * 1024
    max_rows_by_vmem = max(8, budget_bytes // (2 * Hp * 4))
    tile = min(1024, _round_up(B, 8), max_rows_by_vmem)
    return max(8, (tile // 8) * 8)


@functools.partial(jax.jit, static_argnames=("tile_b",))
def toynn_forward(x, w1, b1, w2, b2, tile_b=None):
    """x: (B, 1); w1: (H, 1); b1: (H,); w2: (1, H); b2: (1,).

    Returns (hidden (B, H), out (B, 1)) matching ToyNN.forward.
    """
    B = x.shape[0]
    H = w1.shape[0]

    Hp = _round_up(max(H, 1), 128)              # lane-dense hidden blocks
    if tile_b is None:
        tile_b = _choose_tile_b(B, Hp)
    Bp = _round_up(B, tile_b)
    num_tiles = Bp // tile_b

    f32 = jnp.float32
    # Zero-pad: padded lanes give ReLU(0) = 0 hidden columns and zero weight in
    # the reduction; padded batch rows are sliced off below.
    x_p = jnp.zeros((Bp, 1), f32).at[:B, :].set(x.astype(f32))
    w1_t = jnp.zeros((1, Hp), f32).at[:, :H].set(w1.astype(f32).reshape(1, H))
    b1_r = jnp.zeros((1, Hp), f32).at[:, :H].set(b1.astype(f32).reshape(1, H))
    w2_r = jnp.zeros((1, Hp), f32).at[:, :H].set(w2.astype(f32).reshape(1, H))
    b2_r = b2.astype(f32).reshape(1, 1)

    hidden_p, out_p = pl.pallas_call(
        toynn_kernel,
        out_shape=(
            jax.ShapeDtypeStruct((Bp, Hp), f32),
            jax.ShapeDtypeStruct((Bp, 1), f32),
        ),
        grid=(num_tiles,),
        in_specs=[
            pl.BlockSpec((tile_b, 1), lambda i: (i, 0)),           # x tile
            pl.BlockSpec((1, Hp), lambda i: (0, 0)),               # W1^T (resident)
            pl.BlockSpec((1, Hp), lambda i: (0, 0)),               # b1   (resident)
            pl.BlockSpec((1, Hp), lambda i: (0, 0)),               # W2   (resident)
            pl.BlockSpec(memory_space=pltpu.MemorySpace.SMEM),     # b2 scalar
        ],
        out_specs=(
            pl.BlockSpec((tile_b, Hp), lambda i: (i, 0)),          # hidden tile
            pl.BlockSpec((tile_b, 1), lambda i: (i, 0)),           # out tile
        ),
        compiler_params=pltpu.CompilerParams(
            dimension_semantics=("parallel",)),
    )(x_p, w1_t, b1_r, w2_r, b2_r)

    return hidden_p[:B, :H], out_p[:B, :]


def init_params(n_hidden, key):
    """Deterministic parameter init mirroring ToyNN(n_hidden, grid=True)."""
    H = n_hidden
    # Hidden linear (grid=True init): alternating +1 / -1 weights,
    # bias = -W[:, 0] * linspace(-1, 1, H).
    w1 = jnp.where(jnp.arange(H) % 2 == 0, 1.0, -1.0).astype(jnp.float32)
    w1 = w1.reshape(H, 1)                                               # (H, 1)
    b1 = (-w1[:, 0] * jnp.linspace(-1.0, 1.0, H)).astype(jnp.float32)   # (H,)
    # Output linear: weight filled with sqrt(1/H); bias drawn deterministically
    # from `key` in the torch-default range uniform(-1/sqrt(H), 1/sqrt(H)).
    w2 = jnp.full((1, H), jnp.sqrt(1.0 / H), dtype=jnp.float32)         # (1, H)
    bound = 1.0 / jnp.sqrt(jnp.float32(H))
    b2 = jax.random.uniform(key, (1,), jnp.float32, -bound, bound)      # (1,)
    return w1, b1, w2, b2


def reference_forward(x, w1, b1, w2, b2):
    hidden = jnp.maximum(x @ w1.T + b1[None, :], 0.0)
    out = hidden @ w2.T + b2[None, :]
    return hidden, out


if __name__ == "__main__":
    key = jax.random.PRNGKey(0)
    k_x, k_b2, k_x2, k_p2 = jax.random.split(key, 4)

    # Case 1: toy shapes implied by the module (B=8, H=32), default tiling.
    B, H = 8, 32
    x = jax.random.uniform(k_x, (B, 1), jnp.float32, -1.0, 1.0)
    w1, b1, w2, b2 = init_params(H, k_b2)
    hidden, out = toynn_forward(x, w1, b1, w2, b2)
    jax.block_until_ready((hidden, out))
    hidden_ref, out_ref = reference_forward(x, w1, b1, w2, b2)
    assert hidden.shape == (B, H) and out.shape == (B, 1)
    assert jnp.allclose(hidden, hidden_ref, atol=1e-5, rtol=1e-5)
    assert jnp.allclose(out, out_ref, atol=1e-5, rtol=1e-5)

    # Case 2: non-128-aligned H + multi-tile grid (exercises padding + tiling).
    B2, H2 = 48, 200
    x2 = jax.random.uniform(k_x2, (B2, 1), jnp.float32, -2.0, 2.0)
    w1b, b1b, w2b, b2b = init_params(H2, k_p2)
    hidden2, out2 = toynn_forward(x2, w1b, b1b, w2b, b2b, tile_b=16)
    jax.block_until_ready((hidden2, out2))
    hidden2_ref, out2_ref = reference_forward(x2, w1b, b1b, w2b, b2b)
    assert hidden2.shape == (B2, H2) and out2.shape == (B2, 1)
    assert jnp.allclose(hidden2, hidden2_ref, atol=1e-5, rtol=1e-5)
    assert jnp.allclose(out2, out2_ref, atol=1e-5, rtol=1e-5)

    print("KERNEL_OK")
</pallas_src>

<mosaic_0001>
module attributes {stable_mosaic.version = 11 : i64} {
  func.func @toynn_kernel(%arg0: i32, %arg1: memref<8x1xf32, #tpu.memory_space<vmem>>, %arg2: memref<1x128xf32, #tpu.memory_space<vmem>>, %arg3: memref<1x128xf32, #tpu.memory_space<vmem>>, %arg4: memref<1x128xf32, #tpu.memory_space<vmem>>, %arg5: memref<1x1xf32, #tpu.memory_space<smem>>, %arg6: memref<8x128xf32, #tpu.memory_space<vmem>>, %arg7: memref<8x1xf32, #tpu.memory_space<vmem>>) attributes {dimension_semantics = [#tpu.dimension_semantics<parallel>], iteration_bounds = array<i64: 1>, scalar_prefetch = 0 : i64, scratch_operands = 0 : i64, tpu.core_type = #tpu.core_type<tc>, window_params = [{transform_indices = @transform_0, window_bounds = array<i64: 8, 1>}, {pipeline_mode = #tpu.pipeline_mode<synchronous>, transform_indices = @transform_1, window_bounds = array<i64: 1, 128>}, {pipeline_mode = #tpu.pipeline_mode<synchronous>, transform_indices = @transform_2, window_bounds = array<i64: 1, 128>}, {pipeline_mode = #tpu.pipeline_mode<synchronous>, transform_indices = @transform_3, window_bounds = array<i64: 1, 128>}, {transform_indices = @transform_4, window_bounds = array<i64: 1, 1>}, {transform_indices = @transform_5, window_bounds = array<i64: 8, 128>}, {transform_indices = @transform_6, window_bounds = array<i64: 8, 1>}]} {
    %c0 = arith.constant 0 : index
    %c0_0 = arith.constant 0 : index
    %0 = vector.load %arg1[%c0, %c0_0] : memref<8x1xf32, #tpu.memory_space<vmem>>, vector<8x1xf32>
    %c0_1 = arith.constant 0 : index
    %c0_2 = arith.constant 0 : index
    %1 = vector.load %arg2[%c0_1, %c0_2] : memref<1x128xf32, #tpu.memory_space<vmem>>, vector<1x128xf32>
    %c0_3 = arith.constant 0 : index
    %c0_4 = arith.constant 0 : index
    %2 = vector.load %arg3[%c0_3, %c0_4] : memref<1x128xf32, #tpu.memory_space<vmem>>, vector<1x128xf32>
    %c0_5 = arith.constant 0 : index
    %c0_6 = arith.constant 0 : index
    %3 = vector.load %arg4[%c0_5, %c0_6] : memref<1x128xf32, #tpu.memory_space<vmem>>, vector<1x128xf32>
    %c0_7 = arith.constant 0 : index
    %c0_8 = arith.constant 0 : index
    %4 = memref.load %arg5[%c0_7, %c0_8] : memref<1x1xf32, #tpu.memory_space<smem>>
    %5 = vector.broadcast %0 : vector<8x1xf32> to vector<8x128xf32>
    %6 = vector.broadcast %1 : vector<1x128xf32> to vector<8x128xf32>
    %7 = arith.mulf %5, %6 : vector<8x128xf32>
    %8 = vector.broadcast %2 : vector<1x128xf32> to vector<8x128xf32>
    %9 = arith.addf %7, %8 : vector<8x128xf32>
    %cst = arith.constant 0.000000e+00 : f32
    %10 = vector.broadcast %cst : f32 to vector<8x128xf32>
    %11 = arith.maximumf %9, %10 : vector<8x128xf32>
    %c0_9 = arith.constant 0 : index
    %c0_10 = arith.constant 0 : index
    %12 = vector.load %arg6[%c0_9, %c0_10] : memref<8x128xf32, #tpu.memory_space<vmem>>, vector<8x128xf32>
    tpu.vector_store %arg6[%c0_9, %c0_10], %11 {strides = array<i32>} : memref<8x128xf32, #tpu.memory_space<vmem>>, vector<8x128xf32>,
    %13 = vector.broadcast %3 : vector<1x128xf32> to vector<8x128xf32>
    %14 = arith.mulf %11, %13 : vector<8x128xf32>
    %cst_11 = arith.constant dense<0.000000e+00> : vector<8xf32>
    %15 = vector.multi_reduction <add>, %14, %cst_11 [1] : vector<8x128xf32> to vector<8xf32>
    %16 = vector.shape_cast %15 : vector<8xf32> to vector<8x1xf32>
    %17 = vector.broadcast %4 : f32 to vector<8x1xf32>
    %18 = arith.addf %16, %17 : vector<8x1xf32>
    %c0_12 = arith.constant 0 : index
    %c0_13 = arith.constant 0 : index
    %19 = vector.load %arg7[%c0_12, %c0_13] : memref<8x1xf32, #tpu.memory_space<vmem>>, vector<8x1xf32>
    tpu.vector_store %arg7[%c0_12, %c0_13], %18 {strides = array<i32>} : memref<8x1xf32, #tpu.memory_space<vmem>>, vector<8x1xf32>,
    return
  }
  func.func @transform_0(%arg0: i32) -> (i32, i32) {
    %c0_i32 = arith.constant 0 : i32
    %c0_i32_0 = arith.constant 0 : i32
    return %arg0, %c0_i32 : i32, i32
  }
  func.func @transform_1(%arg0: i32) -> (i32, i32) {
    %c0_i32 = arith.constant 0 : i32
    %c0_i32_0 = arith.constant 0 : i32
    %c0_i32_1 = arith.constant 0 : i32
    return %c0_i32, %c0_i32_0 : i32, i32
  }
  func.func @transform_2(%arg0: i32) -> (i32, i32) {
    %c0_i32 = arith.constant 0 : i32
    %c0_i32_0 = arith.constant 0 : i32
    %c0_i32_1 = arith.constant 0 : i32
    return %c0_i32, %c0_i32_0 : i32, i32
  }
  func.func @transform_3(%arg0: i32) -> (i32, i32) {
    %c0_i32 = arith.constant 0 : i32
    %c0_i32_0 = arith.constant 0 : i32
    %c0_i32_1 = arith.constant 0 : i32
    return %c0_i32, %c0_i32_0 : i32, i32
  }
  func.func @transform_4(%arg0: i32) -> (i32, i32) {
    %c0_i32 = arith.constant 0 : i32
    %c0_i32_0 = arith.constant 0 : i32
    %c0_i32_1 = arith.constant 0 : i32
    return %c0_i32, %c0_i32_0 : i32, i32
  }
  func.func @transform_5(%arg0: i32) -> (i32, i32) {
    %c0_i32 = arith.constant 0 : i32
    %c0_i32_0 = arith.constant 0 : i32
    return %arg0, %c0_i32 : i32, i32
  }
  func.func @transform_6(%arg0: i32) -> (i32, i32) {
    %c0_i32 = arith.constant 0 : i32
    %c0_i32_0 = arith.constant 0 : i32
    return %arg0, %c0_i32 : i32, i32
  }
}

</mosaic_0001>

<llo_original>
// kernel: toynn_forward.1
$region0: #{toynn_forward.1}
  #allocation0 [shape = 'u32[]', space=smem, size = 0x4, offset = 0x4, fixed_abs, tag = 'smem constant byte address 0x4 - core index']
  #allocation1 [shape = 'u32[144,128]{1,0:T(1,128)}', space=vmem, size = 0x12000, scoped, tag = 'internal scratch']
  #allocation2 [shape = 'f32[1,1]{1,0:T(1,128)S(6)}', space=smem, size = 0x200, scoped, tag = 'scoped memory for toynn_forward.1']
  %s0 = inlined_call_operand.vmem [shape: f32[8,1], index: 0, kind: input, shape index: {}]
  %s1 = inlined_call_operand.vmem [shape: f32[1,128], index: 1, kind: input, shape index: {}]
  %s2 = inlined_call_operand.vmem [shape: f32[1,128], index: 2, kind: input, shape index: {}]
  %s3 = inlined_call_operand.vmem [shape: f32[1,128], index: 3, kind: input, shape index: {}]
  %s4 = inlined_call_operand.<no memory space> [shape: f32[1,1], index: 4, kind: input, shape index: {}]
  %s5 = inlined_call_operand.hbm [shape: f32[8,128], index: 5, kind: output, shape index: {0}]
  %s6 = inlined_call_operand.vmem [shape: f32[8,1], index: 6, kind: output, shape index: {1}]
  %7 = xla_tuple %s5, %s6
  %s8 = sld [smem:[#allocation0]]
  $region38: #{toynn_forward.1} parent=0
    _
  %s10 = ssub.s32 1, %s8
  %s11 = scalar_select 0, %s10, %s8
  %12 = sst [smem:[#allocation2]] %s4
  $region1: #{toynn_forward.1} parent=0
    #allocation3 [shape = 'u8[4096]{0}', space=vmem, size = 0x1000, scoped, tag = 'output window, operand 0, single buffered']
    #allocation4 [shape = 's32[1]{0}', space=sflag, size = 0x4, scoped, tag = 'scoped memory for toynn_forward.1']
    %13 = vsyncpa [#allocation4], 0
    // Predicated region
    $region2: #{toynn_forward.1} parent=1 // pred_check
      _
    $region3: #{toynn_forward.1} parent=1 // pred_check_branch
      %15 = sbr.rel (0) target = $region5
    $region4: #{toynn_forward.1} parent=1 // pred_region
      _
    $region5: #{toynn_forward.1} parent=1 // pred_fallthru
      _
    // Predicated region
    $region6: #{toynn_forward.1} parent=1 // pred_check
      _
    $region7: #{toynn_forward.1} parent=1 // pred_check_branch
      %17 = sbr.rel (0) target = $region9
    $region8: #{toynn_forward.1} parent=1 // pred_region
      _
    $region9: #{toynn_forward.1} parent=1 // pred_fallthru
      _
    // Predicated region
    $region10: #{toynn_forward.1} parent=1 // pred_check
      _
    $region11: #{toynn_forward.1} parent=1 // pred_check_branch
      %19 = sbr.rel (0) target = $region13
    $region12: #{toynn_forward.1} parent=1 // pred_region
      _
    $region13: #{toynn_forward.1} parent=1 // pred_fallthru
      _
    // Predicated region
    $region14: #{toynn_forward.1} parent=1 // pred_check
      _
    $region15: #{toynn_forward.1} parent=1 // pred_check_branch
      %21 = sbr.rel (0) target = $region17
    $region16: #{toynn_forward.1} parent=1 // pred_region
      _
    $region17: #{toynn_forward.1} parent=1 // pred_fallthru
      _
    // Predicated region
    $region18: #{toynn_forward.1} parent=1 // pred_check
      _
    $region19: #{toynn_forward.1} parent=1 // pred_check_branch
      %23 = sbr.rel (0) target = $region21
    $region20: #{toynn_forward.1} parent=1 // pred_region
      _
    $region21: #{toynn_forward.1} parent=1 // pred_fallthru
      _
    %v24 = vld [vmem:[%s0] sm:$0xff]
    %v25 = vld [vmem:[%s1] sm:$0x1]
    %v26 = vld [vmem:[%s2] sm:$0x1]
    %v27 = vld [vmem:[%s3] sm:$0x1]
    %s28 = sld [smem:[#allocation2]]
    %30 = vset.pattern.permute.xlu0 0
    %31 = vperm.xlu0 %30, %v24
    %v32 = vpop.permute.xlu0 %31
    %v35 = vlaneseq
    %v36 = vshrl.u32 %v35, 7
    %v37 = vsub.s32 0, %v36
    %v38 = vrot.slane %v25, %v37
    %v40 = vmul.f32 %v32, %v38
    %v42 = vlaneseq
    %v43 = vshrl.u32 %v42, 7
    %v44 = vsub.s32 0, %v43
    %v45 = vrot.slane %v26, %v44
    %v47 = vadd.f32 %v40, %v45
    %v48 = vmax.f32 %v47, 0.0
    %49 = vst [vmem:[#allocation3] sm:$0xff] %v48
    %v51 = vlaneseq
    %v52 = vshrl.u32 %v51, 7
    %v53 = vsub.s32 0, %v52
    %v54 = vrot.slane %v27, %v53
    %v56 = vmul.f32 %v48, %v54
    %57 = vadd.xlane.f32.xlu0 %v56
    %v58 = vpop.xlane.xlu0 %57
    %v59 = vstv %s28
    %v60 = vadd.f32 %v58, %v59
    %vm61 = vcmask 7168
    %62 = vst.msk [vmem:[%s6] sm:$0xff] %vm61, %v60
    // Predicated region
    $region22: #{toynn_forward.1} parent=1 // pred_check
      _
    $region23: #{toynn_forward.1} parent=1 // pred_check_branch
      %64 = sbr.rel (0) target = $region25
    $region24: #{toynn_forward.1} parent=1 // pred_region
      %s66 = ssub.s32 128, 128
      %67 = vsyncadd [#allocation4], %s66
      %s69 = sshll.u32 [#allocation3], 4
      %s70 = int_to_ptr.vmem [resolvable:$true] %s69
      %72 = dma.vmem_to_hbm [thread:$0]  %s70, 128, %s5, [#allocation4]
    $region25: #{toynn_forward.1} parent=1 // pred_fallthru
      _
    // Predicated region
    $region26: #{toynn_forward.1} parent=1 // pred_check
      _
    $region27: #{toynn_forward.1} parent=1 // pred_check_branch
      %74 = sbr.rel (0) target = $region29
    $region28: #{toynn_forward.1} parent=1 // pred_region
      _
    $region29: #{toynn_forward.1} parent=1 // pred_fallthru
      _
    // Predicated region
    $region30: #{toynn_forward.1} parent=1 // pred_check
      _
    $region31: #{toynn_forward.1} parent=1 // pred_check_branch
      %76 = sbr.rel (0) target = $region33
    $region32: #{toynn_forward.1} parent=1 // pred_region
      %77 = dma.done [#allocation4], 128
    $region33: #{toynn_forward.1} parent=1 // pred_fallthru
      _
    // Predicated region
    $region34: #{toynn_forward.1} parent=1 // pred_check
      _
    $region35: #{toynn_forward.1} parent=1 // pred_check_branch
      %79 = sbr.rel (0) target = $region37
    $region36: #{toynn_forward.1} parent=1 // pred_region
      _
    $region37: #{toynn_forward.1} parent=1 // pred_fallthru
      _
    %80 = vsyncpa [#allocation4], 1

</llo_original>
